<compile_context>
chip_gen: v5e
topology: v5e:2x2
jax: 0.10.0
libtpu: 0.0.40
codegen_flags: <defaults>
</compile_context>

<pallas_src>
import functools

import jax
import jax.numpy as jnp
from jax.experimental import pallas as pl
from jax.experimental.pallas import tpu as pltpu

IN_FEATURES = 42
OUT_FEATURES = 7
DEFAULT_TILE_B = 1024  # multiple of 8; safe under v5e's 16 MiB scoped VMEM default


def _linear_kernel(x_ref, w_ref, b_ref, o_ref):
    # x_ref: (TB, 42)  w_ref: (42, 7)  b_ref: (1, 7)  o_ref: (TB, 7)
    acc = jnp.dot(x_ref[...], w_ref[...], preferred_element_type=jnp.float32)
    o_ref[...] = (acc + b_ref[...]).astype(o_ref.dtype)


def _round_up(n, m):
    return ((n + m - 1) // m) * m


def prepare_params(weight, bias):
    """One-time conversion from PyTorch nn.Linear layout.

    weight: (7, 42) -> w_t (42, 7) so the kernel computes x @ W
    bias:   (7,)    -> b2d (1, 7)
    Done once, outside the per-call hot path.
    """
    return weight.T, bias.reshape(1, OUT_FEATURES)


@functools.partial(jax.jit, static_argnames=("tile_b", "use_pallas"))
def neural_network_forward(x, w_t, b2d, *, tile_b=DEFAULT_TILE_B, use_pallas=True):
    """Forward pass of NeuralNetwork.

    Args:
      x:    (B, ...) float32 — flattened to (B, 42) like nn.Flatten().
      w_t:  (42, 7) float32  — pre-transposed weight (see prepare_params).
      b2d:  (1, 7)  float32  — pre-reshaped bias.
      tile_b: batch tile size (multiple of 8).
      use_pallas: set False for tiny batches to let XLA fuse the op instead.
    Returns:
      logits: (B, 7) float32.
    """
    B = x.shape[0]
    x2d = x.reshape(B, -1)                        # nn.Flatten()
    assert x2d.shape[1] == IN_FEATURES, (
        f"expected {IN_FEATURES} features, got {x2d.shape[1]}")

    # Dropout(p=0.5) in eval mode == identity (no-op).

    if not use_pallas:
        # Tiny-batch fast path: fixed pallas_call overhead dwarfs the matmul.
        return x2d @ w_t + b2d

    # Batch tile: multiple of 8 sublanes, never larger than needed.
    tb = min(tile_b, _round_up(B, 8))
    grid = (pl.cdiv(B, tb),)                      # ragged last tile handled by Pallas

    out = pl.pallas_call(
        _linear_kernel,
        out_shape=jax.ShapeDtypeStruct((B, OUT_FEATURES), jnp.float32),
        grid=grid,
        in_specs=[
            pl.BlockSpec((tb, IN_FEATURES), lambda i: (i, 0)),        # streamed
            pl.BlockSpec((IN_FEATURES, OUT_FEATURES), lambda i: (0, 0)),  # resident
            pl.BlockSpec((1, OUT_FEATURES), lambda i: (0, 0)),            # resident
        ],
        out_specs=pl.BlockSpec((tb, OUT_FEATURES), lambda i: (i, 0)),
        compiler_params=pltpu.CompilerParams(
            dimension_semantics=("parallel",),    # megacore sharding on v7x
        ),
    )(x2d, w_t, b2d)
    return out


if __name__ == "__main__":
    key = jax.random.PRNGKey(0)
    k_x, k_w, k_b, k_x2 = jax.random.split(key, 4)

    # Deterministic parameter init matching nn.Linear(42, 7) shapes:
    # PyTorch uses U(-1/sqrt(fan_in), 1/sqrt(fan_in)) with fan_in = 42.
    bound = 1.0 / (IN_FEATURES ** 0.5)
    weight = jax.random.uniform(k_w, (OUT_FEATURES, IN_FEATURES), jnp.float32,
                                -bound, bound)
    bias = jax.random.uniform(k_b, (OUT_FEATURES,), jnp.float32, -bound, bound)
    w_t, b2d = prepare_params(weight, bias)       # hoisted out of the hot path

    # Case 1: batch that exercises tiling + ragged last tile.
    # (B=20, 6, 7) flattens to (20, 42); tile_b=16 -> grid=(2,), last tile padded.
    x_big = jax.random.normal(k_x, (20, 6, 7), dtype=jnp.float32)
    logits_big = neural_network_forward(x_big, w_t, b2d, tile_b=16)
    logits_big = jax.block_until_ready(logits_big)
    ref_big = x_big.reshape(20, -1) @ weight.T + bias
    assert logits_big.shape == (20, OUT_FEATURES)
    assert jnp.allclose(logits_big, ref_big, atol=1e-5), "mismatch (tiled path)"

    # Case 2: tiny batch through the Pallas kernel (single tile).
    x_small = jax.random.normal(k_x2, (8, 6, 7), dtype=jnp.float32)
    logits_small = neural_network_forward(x_small, w_t, b2d)
    logits_small = jax.block_until_ready(logits_small)
    ref_small = x_small.reshape(8, -1) @ weight.T + bias
    assert logits_small.shape == (8, OUT_FEATURES)
    assert jnp.allclose(logits_small, ref_small, atol=1e-5), "mismatch (small path)"

    # Case 3: tiny batch via the XLA fast path (perf recommendation for small B).
    logits_xla = jax.block_until_ready(
        neural_network_forward(x_small, w_t, b2d, use_pallas=False))
    assert jnp.allclose(logits_xla, ref_small, atol=1e-5), "mismatch (xla path)"

    print("KERNEL_OK")
</pallas_src>

<mosaic_0001>
module attributes {stable_mosaic.version = 11 : i64} {
  func.func @_linear_kernel(%arg0: i32, %arg1: memref<16x42xf32, #tpu.memory_space<vmem>>, %arg2: memref<42x7xf32, #tpu.memory_space<vmem>>, %arg3: memref<1x7xf32, #tpu.memory_space<vmem>>, %arg4: memref<16x7xf32, #tpu.memory_space<vmem>>) attributes {dimension_semantics = [#tpu.dimension_semantics<parallel>], iteration_bounds = array<i64: 2>, scalar_prefetch = 0 : i64, scratch_operands = 0 : i64, tpu.core_type = #tpu.core_type<tc>, window_params = [{transform_indices = @transform_0, window_bounds = array<i64: 16, 42>}, {pipeline_mode = #tpu.pipeline_mode<synchronous>, transform_indices = @transform_1, window_bounds = array<i64: 42, 7>}, {pipeline_mode = #tpu.pipeline_mode<synchronous>, transform_indices = @transform_2, window_bounds = array<i64: 1, 7>}, {transform_indices = @transform_3, window_bounds = array<i64: 16, 7>}]} {
    %c0 = arith.constant 0 : index
    %c0_0 = arith.constant 0 : index
    %0 = vector.load %arg1[%c0, %c0_0] : memref<16x42xf32, #tpu.memory_space<vmem>>, vector<16x42xf32>
    %c0_1 = arith.constant 0 : index
    %c0_2 = arith.constant 0 : index
    %1 = vector.load %arg2[%c0_1, %c0_2] : memref<42x7xf32, #tpu.memory_space<vmem>>, vector<42x7xf32>
    %cst = arith.constant dense<0.000000e+00> : vector<16x7xf32>
    %2 = tpu.matmul %0, %1, %cst {dimension_numbers = #tpu.dot_dimension_numbers<[1], [0], [0], [1], [0, 0, 1, 1], [], []>} : vector<16x42xf32>, vector<42x7xf32>, vector<16x7xf32> -> vector<16x7xf32>
    %c0_3 = arith.constant 0 : index
    %c0_4 = arith.constant 0 : index
    %3 = vector.load %arg3[%c0_3, %c0_4] : memref<1x7xf32, #tpu.memory_space<vmem>>, vector<1x7xf32>
    %4 = vector.broadcast %3 : vector<1x7xf32> to vector<16x7xf32>
    %5 = arith.addf %2, %4 : vector<16x7xf32>
    %c0_5 = arith.constant 0 : index
    %c0_6 = arith.constant 0 : index
    %6 = vector.load %arg4[%c0_5, %c0_6] : memref<16x7xf32, #tpu.memory_space<vmem>>, vector<16x7xf32>
    tpu.vector_store %arg4[%c0_5, %c0_6], %5 {strides = array<i32>} : memref<16x7xf32, #tpu.memory_space<vmem>>, vector<16x7xf32>,
    return
  }
  func.func @transform_0(%arg0: i32) -> (i32, i32) {
    %c0_i32 = arith.constant 0 : i32
    %c0_i32_0 = arith.constant 0 : i32
    return %arg0, %c0_i32 : i32, i32
  }
  func.func @transform_1(%arg0: i32) -> (i32, i32) {
    %c0_i32 = arith.constant 0 : i32
    %c0_i32_0 = arith.constant 0 : i32
    %c0_i32_1 = arith.constant 0 : i32
    return %c0_i32, %c0_i32_0 : i32, i32
  }
  func.func @transform_2(%arg0: i32) -> (i32, i32) {
    %c0_i32 = arith.constant 0 : i32
    %c0_i32_0 = arith.constant 0 : i32
    %c0_i32_1 = arith.constant 0 : i32
    return %c0_i32, %c0_i32_0 : i32, i32
  }
  func.func @transform_3(%arg0: i32) -> (i32, i32) {
    %c0_i32 = arith.constant 0 : i32
    %c0_i32_0 = arith.constant 0 : i32
    return %arg0, %c0_i32 : i32, i32
  }
}

</mosaic_0001>

<llo_original>
// kernel: neural_network_forward.1
$region0: #{neural_network_forward.1}
  #allocation0 [shape = 'u32[]', space=smem, size = 0x4, offset = 0x4, fixed_abs, tag = 'smem constant byte address 0x4 - core index']
  #allocation1 [shape = 'u32[72,128]{1,0:T(1,128)}', space=vmem, size = 0x9000, scoped, tag = 'internal scratch']
  %s0 = inlined_call_operand.vmem [shape: f32[20,42], index: 0, kind: input, shape index: {}]
  %s1 = inlined_call_operand.vmem [shape: f32[42,7], index: 1, kind: input, shape index: {}]
  %s2 = inlined_call_operand.vmem [shape: f32[1,7], index: 2, kind: input, shape index: {}]
  %s3 = inlined_call_operand.vmem [shape: f32[20,7], index: 3, kind: output, shape index: {}]
  %s4 = sld [smem:[#allocation0]]
  $region93: #{neural_network_forward.1} parent=0
    _
  %s6 = ssub.s32 1, %s4
  %s7 = scalar_select 0, %s6, %s4
  $region1: #{neural_network_forward.1} parent=0
    #allocation2 [shape = 'u8[16384]{0}', space=vmem, size = 0x4000, scoped, tag = 'output window, operand 0']
    loop: start=0, step=1, limit=4
    $region2: #{neural_network_forward.1} parent=1 // loop_pre_header
      _
    $region3: #{neural_network_forward.1} parent=1 // loop_header
      %s9 = sphi 0, %s13
      %p10 = scmp.ge.s32.totalorder %s9, 4
      %s19 = sphi 0, %s21
      %s22 = sphi 0, %s19
      %s23 = sphi 0, %s22
      %s39 = sphi 0, %s23
      %s43 = sphi 0, %s43
      %s45 = sphi 0, %s43
      %s46 = sphi 0, %s45
      %s60 = sphi 0, %s46
      %s64 = sphi 0, %s64
      %s66 = sphi 0, %s64
      %s67 = sphi 0, %s66
      %s81 = sphi 0, %s67
      %s87 = sphi 0, %s89
      %s90 = sphi 0, %s87
      %s91 = sphi 0, %s90
      %s107 = sphi 0, %s91
    $region4: #{neural_network_forward.1} parent=1 // loop_header_branch
      %12 = sbr.rel (%p10) target = $region8
    $region5: #{neural_network_forward.1} parent=1 // loop_body
      %s14 = ssub.s32 %s9, 1
      %s15 = ssub.s32 %s9, 2
      %s16 = sadd.s32 %s9, 1
      %s17 = ssub.s32 %s9, %s16
      %p18 = scmp.eq.s32.totalorder %s17, 0
      %s20 = sadd.s32 %s19, 1
      %s21 = scalar_select %p18, %s19, %s20
      %p24 = pneg %p18
      %p25 = scmp.eq.s32.totalorder %s9, 1
      %p26 = por %p24, %p25
      %p27 = scmp.ne.s32.totalorder %s19, %s22
      %p28 = scmp.eq.s32.totalorder %s9, 0
      %p29 = por %p27, %p28
      %p30 = scmp.ne.s32.totalorder %s19, %s22
      %p31 = scmp.eq.s32.totalorder %s14, 1
      %p32 = por %p30, %p31
      %p33 = scmp.ne.s32.totalorder %s22, %s23
      %p34 = scmp.eq.s32.totalorder %s14, 0
      %p35 = por %p33, %p34
      %p36 = scmp.ne.s32.totalorder %s22, %s23
      %p37 = scmp.eq.s32.totalorder %s15, 1
      %p38 = por %p36, %p37
      %p40 = scmp.ne.s32.totalorder %s23, %s39
      %p41 = scmp.eq.s32.totalorder %s15, 0
      %p42 = por %p40, %p41
      %s44 = sadd.s32 %s43, 1
      %p47 = scmp.eq.s32.totalorder %s9, 1
      %p48 = scmp.ne.s32.totalorder %s43, %s45
      %p49 = scmp.eq.s32.totalorder %s9, 0
      %p50 = por %p48, %p49
      %p51 = scmp.ne.s32.totalorder %s43, %s45
      %p52 = scmp.eq.s32.totalorder %s14, 1
      %p53 = por %p51, %p52
      %p54 = scmp.ne.s32.totalorder %s45, %s46
      %p55 = scmp.eq.s32.totalorder %s14, 0
      %p56 = por %p54, %p55
      %p57 = scmp.ne.s32.totalorder %s45, %s46
      %p58 = scmp.eq.s32.totalorder %s15, 1
      %p59 = por %p57, %p58
      %p61 = scmp.ne.s32.totalorder %s46, %s60
      %p62 = scmp.eq.s32.totalorder %s15, 0
      %p63 = por %p61, %p62
      %s65 = sadd.s32 %s64, 1
      %p68 = scmp.eq.s32.totalorder %s9, 1
      %p69 = scmp.ne.s32.totalorder %s64, %s66
      %p70 = scmp.eq.s32.totalorder %s9, 0
      %p71 = por %p69, %p70
      %p72 = scmp.ne.s32.totalorder %s64, %s66
      %p73 = scmp.eq.s32.totalorder %s14, 1
      %p74 = por %p72, %p73
      %p75 = scmp.ne.s32.totalorder %s66, %s67
      %p76 = scmp.eq.s32.totalorder %s14, 0
      %p77 = por %p75, %p76
      %p78 = scmp.ne.s32.totalorder %s66, %s67
      %p79 = scmp.eq.s32.totalorder %s15, 1
      %p80 = por %p78, %p79
      %p82 = scmp.ne.s32.totalorder %s67, %s81
      %p83 = scmp.eq.s32.totalorder %s15, 0
      %p84 = por %p82, %p83
      %s85 = ssub.s32 %s9, %s16
      %p86 = scmp.eq.s32.totalorder %s85, 0
      %s88 = sadd.s32 %s87, 1
      %s89 = scalar_select %p86, %s87, %s88
      %p92 = pneg %p86
      %p93 = scmp.eq.s32.totalorder %s9, 1
      %p94 = por %p92, %p93
      %p95 = scmp.ne.s32.totalorder %s87, %s90
      %p96 = scmp.eq.s32.totalorder %s9, 0
      %p97 = por %p95, %p96
      %p98 = scmp.ne.s32.totalorder %s87, %s90
      %p99 = scmp.eq.s32.totalorder %s14, 1
      %p100 = por %p98, %p99
      %p101 = scmp.ne.s32.totalorder %s90, %s91
      %p102 = scmp.eq.s32.totalorder %s14, 0
      %p103 = por %p101, %p102
      %p104 = scmp.ne.s32.totalorder %s90, %s91
      %p105 = scmp.eq.s32.totalorder %s15, 1
      %p106 = por %p104, %p105
      %p108 = scmp.ne.s32.totalorder %s91, %s107
      %p109 = scmp.eq.s32.totalorder %s15, 0
      %p110 = por %p108, %p109
      %p111 = scmp.le.s32.totalorder 1, %s9
      %p112 = scmp.lt.s32.totalorder %s9, 3
      %p113 = pnand %p111, %p112
      %p114 = pneg %p113
      // Predicated region
      $region9: #{neural_network_forward.1} parent=5 // pred_check
        _
      $region10: #{neural_network_forward.1} parent=5 // pred_check_branch
        %116 = sbr.rel (%p113) target = $region12
      $region11: #{neural_network_forward.1} parent=5 // pred_region
        %s117 = ssub.s32 %s9, 1
        // Predicated region
        $region13: #{neural_network_forward.1} parent=11 // pred_check
          %p118 = pneg %p56
        $region14: #{neural_network_forward.1} parent=11 // pred_check_branch
          %120 = sbr.rel (%p118) target = $region16
        $region15: #{neural_network_forward.1} parent=11 // pred_region
          _
        $region16: #{neural_network_forward.1} parent=11 // pred_fallthru
          _
        // Predicated region
        $region17: #{neural_network_forward.1} parent=11 // pred_check
          %p121 = pneg %p77
        $region18: #{neural_network_forward.1} parent=11 // pred_check_branch
          %123 = sbr.rel (%p121) target = $region20
        $region19: #{neural_network_forward.1} parent=11 // pred_region
          _
        $region20: #{neural_network_forward.1} parent=11 // pred_fallthru
          _
      $region12: #{neural_network_forward.1} parent=5 // pred_fallthru
        _
      %p124 = scmp.lt.s32.totalorder %s9, 2
      // Predicated region
      $region21: #{neural_network_forward.1} parent=5 // pred_check
        %p125 = pneg %p124
      $region22: #{neural_network_forward.1} parent=5 // pred_check_branch
        %127 = sbr.rel (%p125) target = $region24
      $region23: #{neural_network_forward.1} parent=5 // pred_region
        // Predicated region
        $region25: #{neural_network_forward.1} parent=23 // pred_check
          %p128 = pneg %p29
        $region26: #{neural_network_forward.1} parent=23 // pred_check_branch
          %130 = sbr.rel (%p128) target = $region28
        $region27: #{neural_network_forward.1} parent=23 // pred_region
          %s131 = smul.u32 2, %s9
          %s132 = ssub.s32 3, %s131
          %p133 = scmp.lt.s32.totalorder %s132, 2
          %s134 = scalar_select %p133, %s132, 2
          %s135 = smul.u32 8, %s134
          %p136 = scmp.lt.s32.totalorder %s131, 2
          %s137 = scalar_select %p136, %s131, 2
          %s138 = smul.addr %s137, 8
          %s139 = scalar_lea.vmem %s0, %s138
          %s140 = smul.u32 2, %s9
          %s141 = ssub.s32 3, %s140
          %p142 = scmp.lt.s32.totalorder %s141, 2
          %s143 = scalar_select %p142, %s141, 2
          %s144 = smul.u32 8, %s143
        $region28: #{neural_network_forward.1} parent=23 // pred_fallthru
          _
      $region24: #{neural_network_forward.1} parent=5 // pred_fallthru
        _
      %p145 = scmp.le.s32.totalorder 1, %s9
      %p146 = scmp.lt.s32.totalorder %s9, 3
      %p147 = pnand %p145, %p146
      %p148 = pneg %p147
      // Predicated region
      $region29: #{neural_network_forward.1} parent=5 // pred_check
        _
      $region30: #{neural_network_forward.1} parent=5 // pred_check_branch
        %150 = sbr.rel (%p147) target = $region32
      $region31: #{neural_network_forward.1} parent=5 // pred_region
        %s151 = ssub.s32 %s9, 1
        %s152 = smul.u32 2, %s14
        %s153 = ssub.s32 3, %s152
        %p154 = scmp.lt.s32.totalorder %s153, 2
        %s155 = scalar_select %p154, %s153, 2
        %s156 = smul.u32 8, %s155
        %p157 = scmp.lt.s32.totalorder %s152, 2
        %s158 = scalar_select %p157, %s152, 2
        %s159 = smul.addr %s158, 8
        %s160 = scalar_lea.vmem %s0, %s159
        %p161 = pneg %p35
        %p162 = pneg %p32
        %p163 = pneg %p56
        %p164 = pneg %p53
        %p165 = pneg %p77
        %p166 = pneg %p74
        %p167 = pneg %p103
        %p168 = pneg %p100
        %s169 = sand.u32 %s90, 1
        %s170 = sand.u32 %s90, 1
        %s171 = smul.addr %s170, 16
        %s172 = scalar_lea.vmem [#allocation2], %s171
        %s173 = smul.u32 2, %s14
        %s174 = ssub.s32 3, %s173
        %p175 = scmp.lt.s32.totalorder %s174, 2
        %s176 = scalar_select %p175, %s174, 2
        %s177 = smul.u32 8, %s176
        %p178 = scmp.lt.s32.totalorder %s173, 2
        %s179 = scalar_select %p178, %s173, 2
        %s180 = smul.addr %s179, 8
        %s181 = scalar_lea.vmem %s0, %s180
        %s182 = smul.u32 2, %s14
        %s183 = ssub.s32 3, %s182
        %p184 = scmp.lt.s32.totalorder %s183, 2
        %s185 = scalar_select %p184, %s183, 2
        %s186 = smul.u32 8, %s185
        %s187 = smul.u32 2, %s14
        %s188 = ssub.s32 3, %s187
        %p189 = scmp.lt.s32.totalorder %s188, 2
        %s190 = scalar_select %p189, %s188, 2
        %s191 = smul.u32 8, %s190
        %v192 = vld [vmem:[%s181] sm:$0xff]
        %v193 = vld [vmem:[%s181 + $0x8] sm:$0xff]
        %v194 = vld [vmem:[%s1] sm:$0xff]
        %v195 = vld [vmem:[%s1 + $0x8] sm:$0xff]
        %v196 = vld [vmem:[%s1 + $0x10] sm:$0xff]
        %v197 = vld [vmem:[%s1 + $0x18] sm:$0xff]
        %v198 = vld [vmem:[%s1 + $0x20] sm:$0xff]
        %v199 = vld [vmem:[%s1 + $0x28] sm:$0x3]
        %v200 = vld [vmem:[%s2] sm:$0x1]
        %v202 = vperm.slane %v200, 0
        %vm204 = vcmask 343040
        %v206 = vsel %vm204, %v192, 0
        %v209 = vsel %vm204, %v193, 0
        %vm211 = vcmask 1041408
        %v213 = vsel %vm211, %v199, 0
        %215 = vmatpush.msra.mxu0 0.0
        %216 = vmatpush.msra.mxu0 0.0
        %217 = vmatpush.msra.mxu0 0.0
        %218 = vmatpush.msra.mxu0 0.0
        %219 = vmatpush.msra.mxu0 0.0
        %220 = vmatpush.msra.mxu0 0.0
        %221 = vmatpush.msra.mxu0 0.0
        %222 = vmatpush.msra.mxu0 0.0
        %223 = vmatpush.msra.mxu0 0.0
        %224 = vmatpush.msra.mxu0 0.0
        %225 = vmatpush.msra.mxu0 %v213
        %226 = vmatpush.msra.mxu0 %v198
        %227 = vmatpush.msra.mxu0 %v197
        %228 = vmatpush.msra.mxu0 %v196
        %229 = vmatpush.msra.mxu0 %v195
        %230 = vmatpush.msra.mxu0 %v194
        %231 = vmatmul.f32.gmra.mxu0 %v206
        %v232 = vpop.f32.mrf.mxu0
        %v233 = vadd.f32 %v202, %v232
        %234 = vmatmul.f32.gmra.mxu0 %v209
        %v235 = vpop.f32.mrf.mxu0
        %v236 = vadd.f32 %v202, %v235
        %237 = vdwg.mxu0
        %vm238 = vcmask 56320
        %239 = vst.msk [vmem:[%s172] sm:$0xff] %vm238, %v233
        %240 = vst.msk [vmem:[%s172 + $0x8] sm:$0xff] %vm238, %v236
        %s241 = sand.u32 %s90, 1
        %s242 = sand.u32 %s90, 1
        %s243 = smul.addr %s242, 16
        %s244 = scalar_lea.vmem [#allocation2], %s243
        // Predicated region
        $region33: #{neural_network_forward.1} parent=31 // pred_check
          %p245 = pneg %p100
        $region34: #{neural_network_forward.1} parent=31 // pred_check_branch
          %247 = sbr.rel (%p245) target = $region36
        $region35: #{neural_network_forward.1} parent=31 // pred_region
          %s248 = smul.u32 2, %s14
          %s249 = ssub.s32 3, %s248
          %p250 = scmp.lt.s32.totalorder %s249, 2
          %s251 = scalar_select %p250, %s249, 2
          %s252 = smul.u32 8, %s251
          %p253 = scmp.ne.s32.totalorder 0, %s252
          %s254 = smul.addr %s248, 8
          %s255 = scalar_lea.vmem %s3, %s254
          // Predicated region
          $region37: #{neural_network_forward.1} parent=35 // pred_check
            %p256 = pneg %p253
          $region38: #{neural_network_forward.1} parent=35 // pred_check_branch
            %258 = sbr.rel (%p256) target = $region40
          $region39: #{neural_network_forward.1} parent=35 // pred_region
            // Predicated region
            $region41: #{neural_network_forward.1} parent=39 // pred_check
              _
            $region42: #{neural_network_forward.1} parent=39 // pred_check_branch
              %260 = sbr.rel (0) target = $region44
            $region43: #{neural_network_forward.1} parent=39 // pred_region
              // Predicated region
              $region63: #{neural_network_forward.1} parent=43 // pred_check
                _
              $region64: #{neural_network_forward.1} parent=43 // pred_check_branch
                %312 = sbr.rel (0) target = $region66
              $region65: #{neural_network_forward.1} parent=43 // pred_region
                %s313 = sshrl.u32 %s251, 1
                // While loop
                $region67: #{neural_network_forward.1} parent=65 // loop_pre_header
                  _
                $region68: #{neural_network_forward.1} parent=65 // loop_header
                  %s315 = sphi 0, %s317
                  %p316 = scmp.ge.s32.totalorder %s315, %s313
                  %s320 = sphi 0, %s329
                  %s321 = sphi %s244, %s332
                  %s322 = sphi %s255, %s333
                $region69: #{neural_network_forward.1} parent=65 // loop_header_branch
                  %319 = sbr.rel (%p316) target = $region73
                $region70: #{neural_network_forward.1} parent=65 // loop_body
                  %v323 = vld [vmem:[%s321] sm:$0xff]
                  %324 = vst [vmem:[%s322] sm:$0xff] %v323
                  %v325 = vld [vmem:[%s321 + $0x8] sm:$0xff]
                  %326 = vst [vmem:[%s322 + $0x8] sm:$0xff] %v325
                  %s327 = sadd.s32 1, %s320
                  %p328 = scmp.ge.s32.totalorder %s327, %s313
                  %s329 = scalar_select %p328, 0, %s327
                  %s330 = smul.u32 %s329, 16
                  %s331 = smul.u32 %s329, 16
                  %s332 = scalar_lea.vmem %s244, %s330 [#allocation2]
                  %s333 = scalar_lea.vmem %s255, %s331
                $region71: #{neural_network_forward.1} parent=65 // loop_footer
                  %s317 = sadd.s32 %s315, 1
                $region72: #{neural_network_forward.1} parent=65 // loop_footer_branch
                  %314 = sbr.rel target = $region68
                $region73: #{neural_network_forward.1} parent=65 // loop_exit
                  _
                %s334 = sshrl.u32 %s251, 1
                %s335 = sand.u32 %s251, 1
                %s336 = smul.u32 %s334, 2
                %s337 = smul.u32 8, %s336
                %s338 = scalar_lea.vmem %s244, %s337 [#allocation2]
                %s339 = smul.u32 8, %s336
                %s340 = scalar_lea.vmem %s255, %s339
                // While loop
                $region74: #{neural_network_forward.1} parent=65 // loop_pre_header
                  _
                $region75: #{neural_network_forward.1} parent=65 // loop_header
                  %s342 = sphi 0, %s344
                  %p343 = scmp.ge.s32.totalorder %s342, %s335
                  %s347 = sphi 0, %s354
                  %s348 = sphi %s338, %s357
                  %s349 = sphi %s340, %s358
                $region76: #{neural_network_forward.1} parent=65 // loop_header_branch
                  %346 = sbr.rel (%p343) target = $region80
                $region77: #{neural_network_forward.1} parent=65 // loop_body
                  %v350 = vld [vmem:[%s348] sm:$0xff]
                  %351 = vst [vmem:[%s349] sm:$0xff] %v350
                  %s352 = sadd.s32 1, %s347
                  %p353 = scmp.ge.s32.totalorder %s352, %s335
                  %s354 = scalar_select %p353, 0, %s352
                  %s355 = smul.u32 %s354, 8
                  %s356 = smul.u32 %s354, 8
                  %s357 = scalar_lea.vmem %s338, %s355 [#allocation2]
                  %s358 = scalar_lea.vmem %s340, %s356
                $region78: #{neural_network_forward.1} parent=65 // loop_footer
                  %s344 = sadd.s32 %s342, 1
                $region79: #{neural_network_forward.1} parent=65 // loop_footer_branch
                  %341 = sbr.rel target = $region75
                $region80: #{neural_network_forward.1} parent=65 // loop_exit
                  _
              $region66: #{neural_network_forward.1} parent=43 // pred_fallthru
                _
              // Predicated region
              $region81: #{neural_network_forward.1} parent=43 // pred_check
                _
              $region82: #{neural_network_forward.1} parent=43 // pred_check_branch
                %360 = sbr.rel target = $region84
              $region83: #{neural_network_forward.1} parent=43 // pred_region
                _
              $region84: #{neural_network_forward.1} parent=43 // pred_fallthru
                _
            $region44: #{neural_network_forward.1} parent=39 // pred_fallthru
              _
            // Predicated region
            $region45: #{neural_network_forward.1} parent=39 // pred_check
              _
            $region46: #{neural_network_forward.1} parent=39 // pred_check_branch
              %262 = sbr.rel target = $region48
            $region47: #{neural_network_forward.1} parent=39 // pred_region
              %s264 = ssub.s32 256, 1
              %s265 = sshrl.u32 %s251, 1
              // While loop
              $region49: #{neural_network_forward.1} parent=47 // loop_pre_header
                _
              $region50: #{neural_network_forward.1} parent=47 // loop_header
                %s267 = sphi 0, %s269
                %p268 = scmp.ge.s32.totalorder %s267, %s265
                %s272 = sphi 0, %s281
                %s273 = sphi %s244, %s284
                %s274 = sphi %s255, %s285
              $region51: #{neural_network_forward.1} parent=47 // loop_header_branch
                %271 = sbr.rel (%p268) target = $region55
              $region52: #{neural_network_forward.1} parent=47 // loop_body
                %v275 = vld [vmem:[%s273] sm:%s264]
                %276 = vst [vmem:[%s274] sm:%s264] %v275
                %v277 = vld [vmem:[%s273 + $0x8] sm:%s264]
                %278 = vst [vmem:[%s274 + $0x8] sm:%s264] %v277
                %s279 = sadd.s32 1, %s272
                %p280 = scmp.ge.s32.totalorder %s279, %s265
                %s281 = scalar_select %p280, 0, %s279
                %s282 = smul.u32 %s281, 16
                %s283 = smul.u32 %s281, 16
                %s284 = scalar_lea.vmem %s244, %s282 [#allocation2]
                %s285 = scalar_lea.vmem %s255, %s283
              $region53: #{neural_network_forward.1} parent=47 // loop_footer
                %s269 = sadd.s32 %s267, 1
              $region54: #{neural_network_forward.1} parent=47 // loop_footer_branch
                %266 = sbr.rel target = $region50
              $region55: #{neural_network_forward.1} parent=47 // loop_exit
                _
              %s286 = sshrl.u32 %s251, 1
              %s287 = sand.u32 %s251, 1
              %s288 = smul.u32 %s286, 2
              %s289 = smul.u32 8, %s288
              %s290 = scalar_lea.vmem %s244, %s289 [#allocation2]
              %s291 = smul.u32 8, %s288
              %s292 = scalar_lea.vmem %s255, %s291
              // While loop
              $region56: #{neural_network_forward.1} parent=47 // loop_pre_header
                _
              $region57: #{neural_network_forward.1} parent=47 // loop_header
                %s294 = sphi 0, %s296
                %p295 = scmp.ge.s32.totalorder %s294, %s287
                %s299 = sphi 0, %s306
                %s300 = sphi %s290, %s309
                %s301 = sphi %s292, %s310
              $region58: #{neural_network_forward.1} parent=47 // loop_header_branch
                %298 = sbr.rel (%p295) target = $region62
              $region59: #{neural_network_forward.1} parent=47 // loop_body
                %v302 = vld [vmem:[%s300] sm:%s264]
                %303 = vst [vmem:[%s301] sm:%s264] %v302
                %s304 = sadd.s32 1, %s299
                %p305 = scmp.ge.s32.totalorder %s304, %s287
                %s306 = scalar_select %p305, 0, %s304
                %s307 = smul.u32 %s306, 8
                %s308 = smul.u32 %s306, 8
                %s309 = scalar_lea.vmem %s290, %s307 [#allocation2]
                %s310 = scalar_lea.vmem %s292, %s308
              $region60: #{neural_network_forward.1} parent=47 // loop_footer
                %s296 = sadd.s32 %s294, 1
              $region61: #{neural_network_forward.1} parent=47 // loop_footer_branch
                %293 = sbr.rel target = $region57
              $region62: #{neural_network_forward.1} parent=47 // loop_exit
                _
            $region48: #{neural_network_forward.1} parent=39 // pred_fallthru
              _
          $region40: #{neural_network_forward.1} parent=35 // pred_fallthru
            _
          %361 = vnop
        $region36: #{neural_network_forward.1} parent=31 // pred_fallthru
          _
      $region32: #{neural_network_forward.1} parent=5 // pred_fallthru
        _
      %p362 = scmp.le.s32.totalorder 2, %s9
      // Predicated region
      $region85: #{neural_network_forward.1} parent=5 // pred_check
        %p363 = pneg %p362
      $region86: #{neural_network_forward.1} parent=5 // pred_check_branch
        %365 = sbr.rel (%p363) target = $region88
      $region87: #{neural_network_forward.1} parent=5 // pred_region
        %s366 = ssub.s32 %s9, 2
        // Predicated region
        $region89: #{neural_network_forward.1} parent=87 // pred_check
          %p367 = pneg %p106
        $region90: #{neural_network_forward.1} parent=87 // pred_check_branch
          %369 = sbr.rel (%p367) target = $region92
        $region91: #{neural_network_forward.1} parent=87 // pred_region
          %s370 = sand.u32 %s91, 1
          %s371 = sand.u32 %s91, 1
          %s372 = smul.addr %s371, 16
          %s373 = scalar_lea.vmem [#allocation2], %s372
        $region92: #{neural_network_forward.1} parent=87 // pred_fallthru
          _
      $region88: #{neural_network_forward.1} parent=5 // pred_fallthru
        _
    $region6: #{neural_network_forward.1} parent=1 // loop_footer
      %s13 = sadd.s32 1, %s9
    $region7: #{neural_network_forward.1} parent=1 // loop_footer_branch
      %8 = sbr.rel target = $region3
    $region8: #{neural_network_forward.1} parent=1 // loop_exit
      _

</llo_original>
